<compile_context>
chip_gen: v7x
topology: tpu7x:2x2x1
jax: 0.10.0
libtpu: 0.0.40
codegen_flags: <defaults>
</compile_context>

<pallas_src>
import functools
import math

import jax
import jax.numpy as jnp
from jax.experimental import pallas as pl
from jax.experimental.pallas import tpu as pltpu


# ------------------------------ Fused kernel ------------------------------- #
def _fused_mha_kernel(x1_ref, x2_ref, wq_ref, bq_ref, wkv_ref, bkv_ref, *rest,
                      num_heads, head_dim, scale, drop_p):
    """One grid step == one batch element; all heads handled here."""
    if drop_p > 0.0:
        rand_ref, o_ref = rest
    else:
        (o_ref,) = rest

    embed_dim = num_heads * head_dim

    # Fused projections: q = x1 @ Wq^T + bq ; [k | v] = x2 @ [Wk^T | Wv^T] + [bk | bv]
    q = (jnp.dot(x1_ref[...], wq_ref[...], preferred_element_type=jnp.float32)
         + bq_ref[...])                                       # (Sq, E)
    kv = (jnp.dot(x2_ref[...], wkv_ref[...], preferred_element_type=jnp.float32)
          + bkv_ref[...])                                     # (Sk, 2E)
    k = kv[:, :embed_dim]                                     # (Sk, E)
    v = kv[:, embed_dim:]                                     # (Sk, E)

    keep_p = 1.0 - drop_p
    outs = []
    for h in range(num_heads):                                # static unrolled loop
        lo = h * head_dim
        hi = lo + head_dim
        qh = q[:, lo:hi]                                      # (Sq, Dh)
        kh = k[:, lo:hi]                                      # (Sk, Dh)
        vh = v[:, lo:hi]                                      # (Sk, Dh)

        # q @ k^T without materializing a transpose: contract last dims.
        s = jax.lax.dot_general(
            qh, kh, (((1,), (1,)), ((), ())),
            preferred_element_type=jnp.float32) * scale       # (Sq, Sk)

        # numerically-stable softmax
        s = s - jnp.max(s, axis=-1, keepdims=True)
        p = jnp.exp(s)
        p = p / jnp.sum(p, axis=-1, keepdims=True)

        if drop_p > 0.0:
            # inverted dropout (torch.nn.Dropout train-mode semantics)
            rh = rand_ref[0, h]                               # (Sq, Sk)
            p = jnp.where(rh < keep_p, p * (1.0 / keep_p), 0.0)

        outs.append(jnp.dot(p, vh, preferred_element_type=jnp.float32))

    # single wide (lane-dense) store: (Sq, E) slab per batch element
    o_ref[...] = jnp.concatenate(outs, axis=-1).astype(o_ref.dtype)


# ------------------------------- Wrappers ---------------------------------- #
def prepare_params(params):
    """One-time weight prep outside the hot path (pre-transpose + kv fusion)."""
    return {
        "wq_t": params["wq"].T,                                          # (E, E)
        "bq": params["bq"].reshape(1, -1),                               # (1, E)
        "wkv_t": jnp.concatenate([params["wk"].T, params["wv"].T], 1),   # (E, 2E)
        "bkv": jnp.concatenate([params["bk"], params["bv"]]).reshape(1, -1),
    }


def model_forward(x1, x2, fused, num_heads, dropout_p, rng_key=None):
    """x1: (B, Sq, E); x2: (B, Sk, E). Returns (B*num_heads, Sq, head_dim)."""
    B1, Sq, E = x1.shape
    B2, Sk, E2 = x2.shape
    assert E == E2
    # NOTE: like the PyTorch reference, q @ k^T requires matching batch*heads.
    assert B1 == B2, "x1 and x2 must have the same batch size"
    head_dim = E // num_heads
    scale = head_dim ** (-0.5)  # qk.div(scaling**-1) == qk * scaling

    x1_2d = x1.reshape(B1 * Sq, E)
    x2_2d = x2.reshape(B2 * Sk, E)

    inputs = [x1_2d, x2_2d, fused["wq_t"], fused["bq"], fused["wkv_t"], fused["bkv"]]
    in_specs = [
        pl.BlockSpec((Sq, E), lambda b: (b, 0)),
        pl.BlockSpec((Sk, E), lambda b: (b, 0)),
        pl.BlockSpec((E, E), lambda b: (0, 0)),
        pl.BlockSpec((1, E), lambda b: (0, 0)),
        pl.BlockSpec((E, 2 * E), lambda b: (0, 0)),
        pl.BlockSpec((1, 2 * E), lambda b: (0, 0)),
    ]

    drop_p = float(dropout_p)
    if drop_p > 0.0:
        assert rng_key is not None
        rand = jax.random.uniform(rng_key, (B1, num_heads, Sq, Sk), jnp.float32)
        inputs.append(rand)
        in_specs.append(
            pl.BlockSpec((1, num_heads, Sq, Sk), lambda b: (b, 0, 0, 0)))

    kern = functools.partial(
        _fused_mha_kernel,
        num_heads=num_heads, head_dim=head_dim, scale=scale, drop_p=drop_p)

    out_slab = pl.pallas_call(
        kern,
        out_shape=jax.ShapeDtypeStruct((B1 * Sq, E), x1.dtype),
        grid=(B1,),
        in_specs=in_specs,
        out_specs=pl.BlockSpec((Sq, E), lambda b: (b, 0)),
        compiler_params=pltpu.CompilerParams(
            dimension_semantics=("parallel",)),
    )(*inputs)

    # head split is cheap plain-JAX glue on the lane-dense slab
    out = out_slab.reshape(B1, Sq, num_heads, head_dim)
    out = jnp.transpose(out, (0, 2, 1, 3)).reshape(B1 * num_heads, Sq, head_dim)
    return out


# ------------------------- Pure-JAX reference (check) ---------------------- #
def _reference(x1, x2, params, num_heads):
    E = x1.shape[-1]
    Dh = E // num_heads
    scale = Dh ** (-0.5)
    hp = jax.lax.Precision.HIGHEST
    q = jnp.einsum("bse,fe->bsf", x1, params["wq"], precision=hp) + params["bq"]
    k = jnp.einsum("bse,fe->bsf", x2, params["wk"], precision=hp) + params["bk"]
    v = jnp.einsum("bse,fe->bsf", x2, params["wv"], precision=hp) + params["bv"]

    def to_batches(x):
        B, S, _ = x.shape
        return x.reshape(B, S, num_heads, Dh).transpose(0, 2, 1, 3).reshape(
            B * num_heads, S, Dh)

    q, k, v = to_batches(q), to_batches(k), to_batches(v)
    s = jnp.einsum("bqd,bkd->bqk", q, k, precision=hp) * scale
    p = jax.nn.softmax(s, axis=-1)
    return jnp.einsum("bqk,bkd->bqd", p, v, precision=hp)


# ---------------------------------- Main ------------------------------------ #
if __name__ == "__main__":
    embed_dim = 32
    num_heads = 4
    dropout_p = 0.1
    B, S = 2, 8

    key = jax.random.PRNGKey(0)
    keys = jax.random.split(key, 9)
    bound = 1.0 / math.sqrt(embed_dim)

    params = {
        "wq": jax.random.uniform(keys[0], (embed_dim, embed_dim), jnp.float32, -bound, bound),
        "bq": jax.random.uniform(keys[1], (embed_dim,), jnp.float32, -bound, bound),
        "wk": jax.random.uniform(keys[2], (embed_dim, embed_dim), jnp.float32, -bound, bound),
        "bk": jax.random.uniform(keys[3], (embed_dim,), jnp.float32, -bound, bound),
        "wv": jax.random.uniform(keys[4], (embed_dim, embed_dim), jnp.float32, -bound, bound),
        "bv": jax.random.uniform(keys[5], (embed_dim,), jnp.float32, -bound, bound),
    }
    fused = prepare_params(params)

    # Matching batches (the reference's (1,10,E) vs (2,10,E) does not broadcast
    # in q @ k^T even in PyTorch).
    x1 = jax.random.normal(keys[6], (B, S, embed_dim), jnp.float32)
    x2 = jax.random.normal(keys[7], (B, S, embed_dim), jnp.float32)

    # correctness check with dropout disabled (deterministic path)
    out_nodrop = model_forward(x1, x2, fused, num_heads, 0.0)
    ref = _reference(x1, x2, params, num_heads)
    assert out_nodrop.shape == ref.shape
    assert jnp.allclose(out_nodrop, ref, atol=1e-2, rtol=1e-2), "mismatch vs reference"

    # full forward with dropout active (training-mode semantics)
    out = model_forward(x1, x2, fused, num_heads, dropout_p, rng_key=keys[8])
    jax.block_until_ready(out)
    assert out.shape == (B * num_heads, S, embed_dim // num_heads)
    print("KERNEL_OK")
</pallas_src>

<mosaic_0001>
module attributes {stable_mosaic.version = 11 : i64} {
  func.func @_fused_mha_kernel(%arg0: i32, %arg1: memref<8x32xf32, #tpu.memory_space<vmem>>, %arg2: memref<8x32xf32, #tpu.memory_space<vmem>>, %arg3: memref<32x32xf32, #tpu.memory_space<vmem>>, %arg4: memref<1x32xf32, #tpu.memory_space<vmem>>, %arg5: memref<32x64xf32, #tpu.memory_space<vmem>>, %arg6: memref<1x64xf32, #tpu.memory_space<vmem>>, %arg7: memref<8x32xf32, #tpu.memory_space<vmem>>) attributes {dimension_semantics = [#tpu.dimension_semantics<parallel>], iteration_bounds = array<i64: 2>, scalar_prefetch = 0 : i64, scratch_operands = 0 : i64, tpu.core_type = #tpu.core_type<tc>, window_params = [{transform_indices = @transform_0, window_bounds = array<i64: 8, 32>}, {transform_indices = @transform_1, window_bounds = array<i64: 8, 32>}, {pipeline_mode = #tpu.pipeline_mode<synchronous>, transform_indices = @transform_2, window_bounds = array<i64: 32, 32>}, {pipeline_mode = #tpu.pipeline_mode<synchronous>, transform_indices = @transform_3, window_bounds = array<i64: 1, 32>}, {pipeline_mode = #tpu.pipeline_mode<synchronous>, transform_indices = @transform_4, window_bounds = array<i64: 32, 64>}, {pipeline_mode = #tpu.pipeline_mode<synchronous>, transform_indices = @transform_5, window_bounds = array<i64: 1, 64>}, {transform_indices = @transform_6, window_bounds = array<i64: 8, 32>}]} {
    %c0 = arith.constant 0 : index
    %c0_0 = arith.constant 0 : index
    %0 = vector.load %arg1[%c0, %c0_0] : memref<8x32xf32, #tpu.memory_space<vmem>>, vector<8x32xf32>
    %c0_1 = arith.constant 0 : index
    %c0_2 = arith.constant 0 : index
    %1 = vector.load %arg3[%c0_1, %c0_2] : memref<32x32xf32, #tpu.memory_space<vmem>>, vector<32x32xf32>
    %cst = arith.constant dense<0.000000e+00> : vector<8x32xf32>
    %2 = tpu.matmul %0, %1, %cst {dimension_numbers = #tpu.dot_dimension_numbers<[1], [0], [0], [1], [0, 0, 1, 1], [], []>} : vector<8x32xf32>, vector<32x32xf32>, vector<8x32xf32> -> vector<8x32xf32>
    %c0_3 = arith.constant 0 : index
    %c0_4 = arith.constant 0 : index
    %3 = vector.load %arg4[%c0_3, %c0_4] : memref<1x32xf32, #tpu.memory_space<vmem>>, vector<1x32xf32>
    %4 = vector.broadcast %3 : vector<1x32xf32> to vector<8x32xf32>
    %5 = arith.addf %2, %4 : vector<8x32xf32>
    %c0_5 = arith.constant 0 : index
    %c0_6 = arith.constant 0 : index
    %6 = vector.load %arg2[%c0_5, %c0_6] : memref<8x32xf32, #tpu.memory_space<vmem>>, vector<8x32xf32>
    %c0_7 = arith.constant 0 : index
    %c0_8 = arith.constant 0 : index
    %7 = vector.load %arg5[%c0_7, %c0_8] : memref<32x64xf32, #tpu.memory_space<vmem>>, vector<32x64xf32>
    %cst_9 = arith.constant dense<0.000000e+00> : vector<8x64xf32>
    %8 = tpu.matmul %6, %7, %cst_9 {dimension_numbers = #tpu.dot_dimension_numbers<[1], [0], [0], [1], [0, 0, 1, 1], [], []>} : vector<8x32xf32>, vector<32x64xf32>, vector<8x64xf32> -> vector<8x64xf32>
    %c0_10 = arith.constant 0 : index
    %c0_11 = arith.constant 0 : index
    %9 = vector.load %arg6[%c0_10, %c0_11] : memref<1x64xf32, #tpu.memory_space<vmem>>, vector<1x64xf32>
    %10 = vector.broadcast %9 : vector<1x64xf32> to vector<8x64xf32>
    %11 = arith.addf %8, %10 : vector<8x64xf32>
    %12 = vector.extract_strided_slice %11 {offsets = [0, 0], sizes = [8, 32], strides = [1, 1]} : vector<8x64xf32> to vector<8x32xf32>
    %13 = vector.extract_strided_slice %11 {offsets = [0, 32], sizes = [8, 32], strides = [1, 1]} : vector<8x64xf32> to vector<8x32xf32>
    %14 = vector.extract_strided_slice %5 {offsets = [0, 0], sizes = [8, 8], strides = [1, 1]} : vector<8x32xf32> to vector<8x8xf32>
    %15 = vector.extract_strided_slice %12 {offsets = [0, 0], sizes = [8, 8], strides = [1, 1]} : vector<8x32xf32> to vector<8x8xf32>
    %16 = vector.extract_strided_slice %13 {offsets = [0, 0], sizes = [8, 8], strides = [1, 1]} : vector<8x32xf32> to vector<8x8xf32>
    %cst_12 = arith.constant dense<0.000000e+00> : vector<8x8xf32>
    %17 = tpu.matmul %14, %15, %cst_12 {dimension_numbers = #tpu.dot_dimension_numbers<[1], [1], [0], [0], [0, 0, 1, 0], [], []>} : vector<8x8xf32>, vector<8x8xf32>, vector<8x8xf32> -> vector<8x8xf32>
    %cst_13 = arith.constant 0.353553385 : f32
    %18 = vector.broadcast %cst_13 : f32 to vector<8x8xf32>
    %19 = arith.mulf %17, %18 : vector<8x8xf32>
    %cst_14 = arith.constant dense<0xFF800000> : vector<8xf32>
    %20 = vector.multi_reduction <maximumf>, %19, %cst_14 [1] : vector<8x8xf32> to vector<8xf32>
    %21 = vector.shape_cast %20 : vector<8xf32> to vector<8x1xf32>
    %22 = vector.broadcast %21 : vector<8x1xf32> to vector<8x8xf32>
    %23 = arith.subf %19, %22 : vector<8x8xf32>
    %24 = math.exp %23 : vector<8x8xf32>
    %cst_15 = arith.constant dense<0.000000e+00> : vector<8xf32>
    %25 = vector.multi_reduction <add>, %24, %cst_15 [1] : vector<8x8xf32> to vector<8xf32>
    %26 = vector.shape_cast %25 : vector<8xf32> to vector<8x1xf32>
    %27 = vector.broadcast %26 : vector<8x1xf32> to vector<8x8xf32>
    %28 = arith.divf %24, %27 : vector<8x8xf32>
    %cst_16 = arith.constant dense<0.000000e+00> : vector<8x8xf32>
    %29 = tpu.matmul %28, %16, %cst_16 {dimension_numbers = #tpu.dot_dimension_numbers<[1], [0], [0], [1], [0, 0, 1, 1], [], []>} : vector<8x8xf32>, vector<8x8xf32>, vector<8x8xf32> -> vector<8x8xf32>
    %30 = vector.extract_strided_slice %5 {offsets = [0, 8], sizes = [8, 8], strides = [1, 1]} : vector<8x32xf32> to vector<8x8xf32>
    %31 = vector.extract_strided_slice %12 {offsets = [0, 8], sizes = [8, 8], strides = [1, 1]} : vector<8x32xf32> to vector<8x8xf32>
    %32 = vector.extract_strided_slice %13 {offsets = [0, 8], sizes = [8, 8], strides = [1, 1]} : vector<8x32xf32> to vector<8x8xf32>
    %cst_17 = arith.constant dense<0.000000e+00> : vector<8x8xf32>
    %33 = tpu.matmul %30, %31, %cst_17 {dimension_numbers = #tpu.dot_dimension_numbers<[1], [1], [0], [0], [0, 0, 1, 0], [], []>} : vector<8x8xf32>, vector<8x8xf32>, vector<8x8xf32> -> vector<8x8xf32>
    %cst_18 = arith.constant 0.353553385 : f32
    %34 = vector.broadcast %cst_18 : f32 to vector<8x8xf32>
    %35 = arith.mulf %33, %34 : vector<8x8xf32>
    %cst_19 = arith.constant dense<0xFF800000> : vector<8xf32>
    %36 = vector.multi_reduction <maximumf>, %35, %cst_19 [1] : vector<8x8xf32> to vector<8xf32>
    %37 = vector.shape_cast %36 : vector<8xf32> to vector<8x1xf32>
    %38 = vector.broadcast %37 : vector<8x1xf32> to vector<8x8xf32>
    %39 = arith.subf %35, %38 : vector<8x8xf32>
    %40 = math.exp %39 : vector<8x8xf32>
    %cst_20 = arith.constant dense<0.000000e+00> : vector<8xf32>
    %41 = vector.multi_reduction <add>, %40, %cst_20 [1] : vector<8x8xf32> to vector<8xf32>
    %42 = vector.shape_cast %41 : vector<8xf32> to vector<8x1xf32>
    %43 = vector.broadcast %42 : vector<8x1xf32> to vector<8x8xf32>
    %44 = arith.divf %40, %43 : vector<8x8xf32>
    %cst_21 = arith.constant dense<0.000000e+00> : vector<8x8xf32>
    %45 = tpu.matmul %44, %32, %cst_21 {dimension_numbers = #tpu.dot_dimension_numbers<[1], [0], [0], [1], [0, 0, 1, 1], [], []>} : vector<8x8xf32>, vector<8x8xf32>, vector<8x8xf32> -> vector<8x8xf32>
    %46 = vector.extract_strided_slice %5 {offsets = [0, 16], sizes = [8, 8], strides = [1, 1]} : vector<8x32xf32> to vector<8x8xf32>
    %47 = vector.extract_strided_slice %12 {offsets = [0, 16], sizes = [8, 8], strides = [1, 1]} : vector<8x32xf32> to vector<8x8xf32>
    %48 = vector.extract_strided_slice %13 {offsets = [0, 16], sizes = [8, 8], strides = [1, 1]} : vector<8x32xf32> to vector<8x8xf32>
    %cst_22 = arith.constant dense<0.000000e+00> : vector<8x8xf32>
    %49 = tpu.matmul %46, %47, %cst_22 {dimension_numbers = #tpu.dot_dimension_numbers<[1], [1], [0], [0], [0, 0, 1, 0], [], []>} : vector<8x8xf32>, vector<8x8xf32>, vector<8x8xf32> -> vector<8x8xf32>
    %cst_23 = arith.constant 0.353553385 : f32
    %50 = vector.broadcast %cst_23 : f32 to vector<8x8xf32>
    %51 = arith.mulf %49, %50 : vector<8x8xf32>
    %cst_24 = arith.constant dense<0xFF800000> : vector<8xf32>
    %52 = vector.multi_reduction <maximumf>, %51, %cst_24 [1] : vector<8x8xf32> to vector<8xf32>
    %53 = vector.shape_cast %52 : vector<8xf32> to vector<8x1xf32>
    %54 = vector.broadcast %53 : vector<8x1xf32> to vector<8x8xf32>
    %55 = arith.subf %51, %54 : vector<8x8xf32>
    %56 = math.exp %55 : vector<8x8xf32>
    %cst_25 = arith.constant dense<0.000000e+00> : vector<8xf32>
    %57 = vector.multi_reduction <add>, %56, %cst_25 [1] : vector<8x8xf32> to vector<8xf32>
    %58 = vector.shape_cast %57 : vector<8xf32> to vector<8x1xf32>
    %59 = vector.broadcast %58 : vector<8x1xf32> to vector<8x8xf32>
    %60 = arith.divf %56, %59 : vector<8x8xf32>
    %cst_26 = arith.constant dense<0.000000e+00> : vector<8x8xf32>
    %61 = tpu.matmul %60, %48, %cst_26 {dimension_numbers = #tpu.dot_dimension_numbers<[1], [0], [0], [1], [0, 0, 1, 1], [], []>} : vector<8x8xf32>, vector<8x8xf32>, vector<8x8xf32> -> vector<8x8xf32>
    %62 = vector.extract_strided_slice %5 {offsets = [0, 24], sizes = [8, 8], strides = [1, 1]} : vector<8x32xf32> to vector<8x8xf32>
    %63 = vector.extract_strided_slice %12 {offsets = [0, 24], sizes = [8, 8], strides = [1, 1]} : vector<8x32xf32> to vector<8x8xf32>
    %64 = vector.extract_strided_slice %13 {offsets = [0, 24], sizes = [8, 8], strides = [1, 1]} : vector<8x32xf32> to vector<8x8xf32>
    %cst_27 = arith.constant dense<0.000000e+00> : vector<8x8xf32>
    %65 = tpu.matmul %62, %63, %cst_27 {dimension_numbers = #tpu.dot_dimension_numbers<[1], [1], [0], [0], [0, 0, 1, 0], [], []>} : vector<8x8xf32>, vector<8x8xf32>, vector<8x8xf32> -> vector<8x8xf32>
    %cst_28 = arith.constant 0.353553385 : f32
    %66 = vector.broadcast %cst_28 : f32 to vector<8x8xf32>
    %67 = arith.mulf %65, %66 : vector<8x8xf32>
    %cst_29 = arith.constant dense<0xFF800000> : vector<8xf32>
    %68 = vector.multi_reduction <maximumf>, %67, %cst_29 [1] : vector<8x8xf32> to vector<8xf32>
    %69 = vector.shape_cast %68 : vector<8xf32> to vector<8x1xf32>
    %70 = vector.broadcast %69 : vector<8x1xf32> to vector<8x8xf32>
    %71 = arith.subf %67, %70 : vector<8x8xf32>
    %72 = math.exp %71 : vector<8x8xf32>
    %cst_30 = arith.constant dense<0.000000e+00> : vector<8xf32>
    %73 = vector.multi_reduction <add>, %72, %cst_30 [1] : vector<8x8xf32> to vector<8xf32>
    %74 = vector.shape_cast %73 : vector<8xf32> to vector<8x1xf32>
    %75 = vector.broadcast %74 : vector<8x1xf32> to vector<8x8xf32>
    %76 = arith.divf %72, %75 : vector<8x8xf32>
    %cst_31 = arith.constant dense<0.000000e+00> : vector<8x8xf32>
    %77 = tpu.matmul %76, %64, %cst_31 {dimension_numbers = #tpu.dot_dimension_numbers<[1], [0], [0], [1], [0, 0, 1, 1], [], []>} : vector<8x8xf32>, vector<8x8xf32>, vector<8x8xf32> -> vector<8x8xf32>
    %78 = tpu.concatenate %29, %45, %61, %77 in 1 : vector<8x8xf32>, vector<8x8xf32>, vector<8x8xf32>, vector<8x8xf32> -> vector<8x32xf32>
    %c0_32 = arith.constant 0 : index
    %c0_33 = arith.constant 0 : index
    %79 = vector.load %arg7[%c0_32, %c0_33] : memref<8x32xf32, #tpu.memory_space<vmem>>, vector<8x32xf32>
    tpu.vector_store %arg7[%c0_32, %c0_33], %78 {strides = array<i32>} : memref<8x32xf32, #tpu.memory_space<vmem>>, vector<8x32xf32>,
    return
  }
  func.func @transform_0(%arg0: i32) -> (i32, i32) {
    %c0_i32 = arith.constant 0 : i32
    %c0_i32_0 = arith.constant 0 : i32
    return %arg0, %c0_i32 : i32, i32
  }
  func.func @transform_1(%arg0: i32) -> (i32, i32) {
    %c0_i32 = arith.constant 0 : i32
    %c0_i32_0 = arith.constant 0 : i32
    return %arg0, %c0_i32 : i32, i32
  }
  func.func @transform_2(%arg0: i32) -> (i32, i32) {
    %c0_i32 = arith.constant 0 : i32
    %c0_i32_0 = arith.constant 0 : i32
    %c0_i32_1 = arith.constant 0 : i32
    return %c0_i32, %c0_i32_0 : i32, i32
  }
  func.func @transform_3(%arg0: i32) -> (i32, i32) {
    %c0_i32 = arith.constant 0 : i32
    %c0_i32_0 = arith.constant 0 : i32
    %c0_i32_1 = arith.constant 0 : i32
    return %c0_i32, %c0_i32_0 : i32, i32
  }
  func.func @transform_4(%arg0: i32) -> (i32, i32) {
    %c0_i32 = arith.constant 0 : i32
    %c0_i32_0 = arith.constant 0 : i32
    %c0_i32_1 = arith.constant 0 : i32
    return %c0_i32, %c0_i32_0 : i32, i32
  }
  func.func @transform_5(%arg0: i32) -> (i32, i32) {
    %c0_i32 = arith.constant 0 : i32
    %c0_i32_0 = arith.constant 0 : i32
    %c0_i32_1 = arith.constant 0 : i32
    return %c0_i32, %c0_i32_0 : i32, i32
  }
  func.func @transform_6(%arg0: i32) -> (i32, i32) {
    %c0_i32 = arith.constant 0 : i32
    %c0_i32_0 = arith.constant 0 : i32
    return %arg0, %c0_i32 : i32, i32
  }
}

</mosaic_0001>

<llo_original>
// kernel: tpu_custom_call.1
$region0: #{tpu_custom_call.1}
  #allocation0 [shape = 'u32[]', space=smem, size = 0x4, offset = 0x4, fixed_abs, tag = 'smem constant byte address 0x4 - core index']
  #allocation1 [shape = 'u32[144,128]{1,0:T(1,128)}', space=vmem, size = 0x12000, scoped, tag = 'internal scratch']
  %s0 = inlined_call_operand.hbm [shape: f32[16,32], index: 0, kind: input, shape index: {}]
  %s1 = inlined_call_operand.hbm [shape: f32[16,32], index: 1, kind: input, shape index: {}]
  %s2 = inlined_call_operand.hbm [shape: f32[32,32], index: 2, kind: input, shape index: {}]
  %s3 = inlined_call_operand.vmem [shape: f32[1,32], index: 3, kind: input, shape index: {}]
  %s4 = inlined_call_operand.hbm [shape: f32[32,64], index: 4, kind: input, shape index: {}]
  %s5 = inlined_call_operand.vmem [shape: f32[1,64], index: 5, kind: input, shape index: {}]
  %s6 = inlined_call_operand.hbm [shape: f32[16,32], index: 6, kind: output, shape index: {}]
  %s7 = sld [smem:[#allocation0]]
  $region73: #{tpu_custom_call.1} parent=0
    _
  %s9 = ssub.s32 1, %s7
  %s10 = scalar_select 0, %s9, %s7
  $region1: #{tpu_custom_call.1} parent=0
    #allocation2 [shape = 'u8[8192]{0}', space=vmem, size = 0x2000, scoped, tag = 'input window, operand 0']
    #allocation3 [shape = 's32[2]{0}', space=sflag, size = 0x8, scoped, tag = 'scoped memory for tpu_custom_call.1']
    #allocation4 [shape = 's32[2]{0}', space=sflag, size = 0x8, scoped, tag = 'scoped memory for tpu_custom_call.1']
    #allocation5 [shape = 'u8[8192]{0}', space=vmem, size = 0x2000, scoped, tag = 'input window, operand 1']
    #allocation6 [shape = 's32[2]{0}', space=sflag, size = 0x8, scoped, tag = 'scoped memory for tpu_custom_call.1']
    #allocation7 [shape = 'u8[16384]{0}', space=vmem, size = 0x4000, scoped, tag = 'input window, operand 2, single buffered']
    #allocation8 [shape = 'u8[16384]{0}', space=vmem, size = 0x4000, scoped, tag = 'input window, operand 4, single buffered']
    #allocation9 [shape = 's32[1]{0}', space=sflag, size = 0x4, scoped, tag = 'scoped memory for tpu_custom_call.1']
    #allocation10 [shape = 'u8[8192]{0}', space=vmem, size = 0x2000, scoped, tag = 'output window, operand 0']
    %11 = vsyncpa [#allocation3], 0
    %s12 = scalar_lea.sflag [#allocation3], 1
    %13 = vsyncpa %s12, 0
    %14 = vsyncpa [#allocation6], 0
    %s15 = scalar_lea.sflag [#allocation6], 1
    %16 = vsyncpa %s15, 0
    %17 = vsyncpa [#allocation9], 0
    %18 = vsyncpa [#allocation4], 0
    %s19 = scalar_lea.sflag [#allocation4], 1
    %20 = vsyncpa %s19, 0
    loop: start=0, step=1, limit=4
    $region2: #{tpu_custom_call.1} parent=1 // loop_pre_header
      _
    $region3: #{tpu_custom_call.1} parent=1 // loop_header
      %s22 = sphi 0, %s26
      %p23 = scmp.ge.s32.totalorder %s22, 4
      %s32 = sphi 0, %s34
      %s35 = sphi 0, %s32
      %s36 = sphi 0, %s35
      %s52 = sphi 0, %s36
      %s58 = sphi 0, %s60
      %s61 = sphi 0, %s58
      %s62 = sphi 0, %s61
      %s78 = sphi 0, %s62
      %s82 = sphi 0, %s82
      %s84 = sphi 0, %s82
      %s85 = sphi 0, %s84
      %s99 = sphi 0, %s85
      %s103 = sphi 0, %s103
      %s105 = sphi 0, %s103
      %s106 = sphi 0, %s105
      %s120 = sphi 0, %s106
      %s124 = sphi 0, %s124
      %s126 = sphi 0, %s124
      %s127 = sphi 0, %s126
      %s141 = sphi 0, %s127
      %s145 = sphi 0, %s145
      %s147 = sphi 0, %s145
      %s148 = sphi 0, %s147
      %s162 = sphi 0, %s148
      %s168 = sphi 0, %s170
      %s171 = sphi 0, %s168
      %s172 = sphi 0, %s171
      %s188 = sphi 0, %s172
    $region4: #{tpu_custom_call.1} parent=1 // loop_header_branch
      %25 = sbr.rel (%p23) target = $region8
    $region5: #{tpu_custom_call.1} parent=1 // loop_body
      %s27 = ssub.s32 %s22, 1
      %s28 = ssub.s32 %s22, 2
      %s29 = sadd.s32 %s22, 1
      %s30 = ssub.s32 %s22, %s29
      %p31 = scmp.eq.s32.totalorder %s30, 0
      %s33 = sadd.s32 %s32, 1
      %s34 = scalar_select %p31, %s32, %s33
      %p37 = pneg %p31
      %p38 = scmp.eq.s32.totalorder %s22, 1
      %p39 = por %p37, %p38
      %p40 = scmp.ne.s32.totalorder %s32, %s35
      %p41 = scmp.eq.s32.totalorder %s22, 0
      %p42 = por %p40, %p41
      %p43 = scmp.ne.s32.totalorder %s32, %s35
      %p44 = scmp.eq.s32.totalorder %s27, 1
      %p45 = por %p43, %p44
      %p46 = scmp.ne.s32.totalorder %s35, %s36
      %p47 = scmp.eq.s32.totalorder %s27, 0
      %p48 = por %p46, %p47
      %p49 = scmp.ne.s32.totalorder %s35, %s36
      %p50 = scmp.eq.s32.totalorder %s28, 1
      %p51 = por %p49, %p50
      %p53 = scmp.ne.s32.totalorder %s36, %s52
      %p54 = scmp.eq.s32.totalorder %s28, 0
      %p55 = por %p53, %p54
      %s56 = ssub.s32 %s22, %s29
      %p57 = scmp.eq.s32.totalorder %s56, 0
      %s59 = sadd.s32 %s58, 1
      %s60 = scalar_select %p57, %s58, %s59
      %p63 = pneg %p57
      %p64 = scmp.eq.s32.totalorder %s22, 1
      %p65 = por %p63, %p64
      %p66 = scmp.ne.s32.totalorder %s58, %s61
      %p67 = scmp.eq.s32.totalorder %s22, 0
      %p68 = por %p66, %p67
      %p69 = scmp.ne.s32.totalorder %s58, %s61
      %p70 = scmp.eq.s32.totalorder %s27, 1
      %p71 = por %p69, %p70
      %p72 = scmp.ne.s32.totalorder %s61, %s62
      %p73 = scmp.eq.s32.totalorder %s27, 0
      %p74 = por %p72, %p73
      %p75 = scmp.ne.s32.totalorder %s61, %s62
      %p76 = scmp.eq.s32.totalorder %s28, 1
      %p77 = por %p75, %p76
      %p79 = scmp.ne.s32.totalorder %s62, %s78
      %p80 = scmp.eq.s32.totalorder %s28, 0
      %p81 = por %p79, %p80
      %s83 = sadd.s32 %s82, 1
      %p86 = scmp.eq.s32.totalorder %s22, 1
      %p87 = scmp.ne.s32.totalorder %s82, %s84
      %p88 = scmp.eq.s32.totalorder %s22, 0
      %p89 = por %p87, %p88
      %p90 = scmp.ne.s32.totalorder %s82, %s84
      %p91 = scmp.eq.s32.totalorder %s27, 1
      %p92 = por %p90, %p91
      %p93 = scmp.ne.s32.totalorder %s84, %s85
      %p94 = scmp.eq.s32.totalorder %s27, 0
      %p95 = por %p93, %p94
      %p96 = scmp.ne.s32.totalorder %s84, %s85
      %p97 = scmp.eq.s32.totalorder %s28, 1
      %p98 = por %p96, %p97
      %p100 = scmp.ne.s32.totalorder %s85, %s99
      %p101 = scmp.eq.s32.totalorder %s28, 0
      %p102 = por %p100, %p101
      %s104 = sadd.s32 %s103, 1
      %p107 = scmp.eq.s32.totalorder %s22, 1
      %p108 = scmp.ne.s32.totalorder %s103, %s105
      %p109 = scmp.eq.s32.totalorder %s22, 0
      %p110 = por %p108, %p109
      %p111 = scmp.ne.s32.totalorder %s103, %s105
      %p112 = scmp.eq.s32.totalorder %s27, 1
      %p113 = por %p111, %p112
      %p114 = scmp.ne.s32.totalorder %s105, %s106
      %p115 = scmp.eq.s32.totalorder %s27, 0
      %p116 = por %p114, %p115
      %p117 = scmp.ne.s32.totalorder %s105, %s106
      %p118 = scmp.eq.s32.totalorder %s28, 1
      %p119 = por %p117, %p118
      %p121 = scmp.ne.s32.totalorder %s106, %s120
      %p122 = scmp.eq.s32.totalorder %s28, 0
      %p123 = por %p121, %p122
      %s125 = sadd.s32 %s124, 1
      %p128 = scmp.eq.s32.totalorder %s22, 1
      %p129 = scmp.ne.s32.totalorder %s124, %s126
      %p130 = scmp.eq.s32.totalorder %s22, 0
      %p131 = por %p129, %p130
      %p132 = scmp.ne.s32.totalorder %s124, %s126
      %p133 = scmp.eq.s32.totalorder %s27, 1
      %p134 = por %p132, %p133
      %p135 = scmp.ne.s32.totalorder %s126, %s127
      %p136 = scmp.eq.s32.totalorder %s27, 0
      %p137 = por %p135, %p136
      %p138 = scmp.ne.s32.totalorder %s126, %s127
      %p139 = scmp.eq.s32.totalorder %s28, 1
      %p140 = por %p138, %p139
      %p142 = scmp.ne.s32.totalorder %s127, %s141
      %p143 = scmp.eq.s32.totalorder %s28, 0
      %p144 = por %p142, %p143
      %s146 = sadd.s32 %s145, 1
      %p149 = scmp.eq.s32.totalorder %s22, 1
      %p150 = scmp.ne.s32.totalorder %s145, %s147
      %p151 = scmp.eq.s32.totalorder %s22, 0
      %p152 = por %p150, %p151
      %p153 = scmp.ne.s32.totalorder %s145, %s147
      %p154 = scmp.eq.s32.totalorder %s27, 1
      %p155 = por %p153, %p154
      %p156 = scmp.ne.s32.totalorder %s147, %s148
      %p157 = scmp.eq.s32.totalorder %s27, 0
      %p158 = por %p156, %p157
      %p159 = scmp.ne.s32.totalorder %s147, %s148
      %p160 = scmp.eq.s32.totalorder %s28, 1
      %p161 = por %p159, %p160
      %p163 = scmp.ne.s32.totalorder %s148, %s162
      %p164 = scmp.eq.s32.totalorder %s28, 0
      %p165 = por %p163, %p164
      %s166 = ssub.s32 %s22, %s29
      %p167 = scmp.eq.s32.totalorder %s166, 0
      %s169 = sadd.s32 %s168, 1
      %s170 = scalar_select %p167, %s168, %s169
      %p173 = pneg %p167
      %p174 = scmp.eq.s32.totalorder %s22, 1
      %p175 = por %p173, %p174
      %p176 = scmp.ne.s32.totalorder %s168, %s171
      %p177 = scmp.eq.s32.totalorder %s22, 0
      %p178 = por %p176, %p177
      %p179 = scmp.ne.s32.totalorder %s168, %s171
      %p180 = scmp.eq.s32.totalorder %s27, 1
      %p181 = por %p179, %p180
      %p182 = scmp.ne.s32.totalorder %s171, %s172
      %p183 = scmp.eq.s32.totalorder %s27, 0
      %p184 = por %p182, %p183
      %p185 = scmp.ne.s32.totalorder %s171, %s172
      %p186 = scmp.eq.s32.totalorder %s28, 1
      %p187 = por %p185, %p186
      %p189 = scmp.ne.s32.totalorder %s172, %s188
      %p190 = scmp.eq.s32.totalorder %s28, 0
      %p191 = por %p189, %p190
      %p192 = scmp.le.s32.totalorder 1, %s22
      %p193 = scmp.lt.s32.totalorder %s22, 3
      %p194 = pnand %p192, %p193
      %p195 = pneg %p194
      // Predicated region
      $region9: #{tpu_custom_call.1} parent=5 // pred_check
        _
      $region10: #{tpu_custom_call.1} parent=5 // pred_check_branch
        %197 = sbr.rel (%p194) target = $region12
      $region11: #{tpu_custom_call.1} parent=5 // pred_region
        %s198 = ssub.s32 %s22, 1
        // Predicated region
        $region13: #{tpu_custom_call.1} parent=11 // pred_check
          %p199 = pneg %p95
        $region14: #{tpu_custom_call.1} parent=11 // pred_check_branch
          %201 = sbr.rel (%p199) target = $region16
        $region15: #{tpu_custom_call.1} parent=11 // pred_region
          %s203 = ssub.s32 512, 512
          %204 = vsyncadd [#allocation6], %s203
          %s205 = sshll.u32 [#allocation7], 4
          %s206 = int_to_ptr.vmem [resolvable:$true] %s205
          %211 = dma.hbm_to_vmem [thread:$0]  %s2, 512, %s206, [#allocation6], 128, 128, 8
        $region16: #{tpu_custom_call.1} parent=11 // pred_fallthru
          _
        // Predicated region
        $region17: #{tpu_custom_call.1} parent=11 // pred_check
          %p212 = pneg %p116
        $region18: #{tpu_custom_call.1} parent=11 // pred_check_branch
          %214 = sbr.rel (%p212) target = $region20
        $region19: #{tpu_custom_call.1} parent=11 // pred_region
          _
        $region20: #{tpu_custom_call.1} parent=11 // pred_fallthru
          _
        // Predicated region
        $region21: #{tpu_custom_call.1} parent=11 // pred_check
          %p215 = pneg %p137
        $region22: #{tpu_custom_call.1} parent=11 // pred_check_branch
          %217 = sbr.rel (%p215) target = $region24
        $region23: #{tpu_custom_call.1} parent=11 // pred_region
          %s219 = ssub.s32 512, 512
          %220 = vsyncadd [#allocation9], %s219
          %s221 = sshll.u32 [#allocation8], 4
          %s222 = int_to_ptr.vmem [resolvable:$true] %s221
          %227 = dma.hbm_to_vmem [thread:$0]  %s4, 512, %s222, [#allocation9], 128, 128, 8
        $region24: #{tpu_custom_call.1} parent=11 // pred_fallthru
          _
        // Predicated region
        $region25: #{tpu_custom_call.1} parent=11 // pred_check
          %p228 = pneg %p158
        $region26: #{tpu_custom_call.1} parent=11 // pred_check_branch
          %230 = sbr.rel (%p228) target = $region28
        $region27: #{tpu_custom_call.1} parent=11 // pred_region
          _
        $region28: #{tpu_custom_call.1} parent=11 // pred_fallthru
          _
      $region12: #{tpu_custom_call.1} parent=5 // pred_fallthru
        _
      %p231 = scmp.lt.s32.totalorder %s22, 2
      // Predicated region
      $region29: #{tpu_custom_call.1} parent=5 // pred_check
        %p232 = pneg %p231
      $region30: #{tpu_custom_call.1} parent=5 // pred_check_branch
        %234 = sbr.rel (%p232) target = $region32
      $region31: #{tpu_custom_call.1} parent=5 // pred_region
        // Predicated region
        $region33: #{tpu_custom_call.1} parent=31 // pred_check
          %p235 = pneg %p42
        $region34: #{tpu_custom_call.1} parent=31 // pred_check_branch
          %237 = sbr.rel (%p235) target = $region36
        $region35: #{tpu_custom_call.1} parent=31 // pred_region
          %s238 = sand.u32 %s32, 1
          %s239 = scalar_lea.sflag [#allocation3], %s238
          %s240 = sand.u32 %s32, 1
          %s241 = smul.addr %s240, 8
          %s242 = scalar_lea.vmem [#allocation2], %s241
          %s244 = ssub.s32 128, 128
          %245 = vsyncadd %s239, %s244
          %s246 = smul.addr %s22, 128
          %s247 = scalar_lea.hbm %s0, %s246
          %s249 = sshll.u32 %s242, 4
          %s250 = int_to_ptr.vmem [resolvable:$true] %s249
          %252 = dma.hbm_to_vmem [thread:$0]  %s247, 128, %s250, %s239
        $region36: #{tpu_custom_call.1} parent=31 // pred_fallthru
          _
        // Predicated region
        $region37: #{tpu_custom_call.1} parent=31 // pred_check
          %p253 = pneg %p68
        $region38: #{tpu_custom_call.1} parent=31 // pred_check_branch
          %255 = sbr.rel (%p253) target = $region40
        $region39: #{tpu_custom_call.1} parent=31 // pred_region
          %s256 = sand.u32 %s22, 1
          %s257 = scalar_lea.sflag [#allocation6], %s256
          %s258 = sand.u32 %s58, 1
          %s259 = smul.addr %s258, 8
          %s260 = scalar_lea.vmem [#allocation5], %s259
          %s262 = ssub.s32 128, 128
          %263 = vsyncadd %s257, %s262
          %s264 = smul.addr %s22, 128
          %s265 = scalar_lea.hbm %s1, %s264
          %s267 = sshll.u32 %s260, 4
          %s268 = int_to_ptr.vmem [resolvable:$true] %s267
          %270 = dma.hbm_to_vmem [thread:$0]  %s265, 128, %s268, %s257
        $region40: #{tpu_custom_call.1} parent=31 // pred_fallthru
          _
      $region32: #{tpu_custom_call.1} parent=5 // pred_fallthru
        _
      %p271 = scmp.le.s32.totalorder 1, %s22
      %p272 = scmp.lt.s32.totalorder %s22, 3
      %p273 = pnand %p271, %p272
      %p274 = pneg %p273
      // Predicated region
      $region41: #{tpu_custom_call.1} parent=5 // pred_check
        _
      $region42: #{tpu_custom_call.1} parent=5 // pred_check_branch
        %276 = sbr.rel (%p273) target = $region44
      $region43: #{tpu_custom_call.1} parent=5 // pred_region
        %s277 = ssub.s32 %s22, 1
        %s278 = sand.u32 %s35, 1
        %s279 = scalar_lea.sflag [#allocation3], %s278
        %s280 = sand.u32 %s35, 1
        %s281 = smul.addr %s280, 8
        %s282 = scalar_lea.vmem [#allocation2], %s281
        // Predicated region
        $region45: #{tpu_custom_call.1} parent=43 // pred_check
          %p283 = pneg %p48
        $region46: #{tpu_custom_call.1} parent=43 // pred_check_branch
          %285 = sbr.rel (%p283) target = $region48
        $region47: #{tpu_custom_call.1} parent=43 // pred_region
          %286 = dma.done %s279, 128
        $region48: #{tpu_custom_call.1} parent=43 // pred_fallthru
          _
        %s287 = sand.u32 %s27, 1
        %s288 = scalar_lea.sflag [#allocation6], %s287
        %s289 = sand.u32 %s61, 1
        %s290 = smul.addr %s289, 8
        %s291 = scalar_lea.vmem [#allocation5], %s290
        // Predicated region
        $region49: #{tpu_custom_call.1} parent=43 // pred_check
          %p292 = pneg %p74
        $region50: #{tpu_custom_call.1} parent=43 // pred_check_branch
          %294 = sbr.rel (%p292) target = $region52
        $region51: #{tpu_custom_call.1} parent=43 // pred_region
          %295 = dma.done %s288, 128
        $region52: #{tpu_custom_call.1} parent=43 // pred_fallthru
          _
        // Predicated region
        $region53: #{tpu_custom_call.1} parent=43 // pred_check
          %p296 = pneg %p95
        $region54: #{tpu_custom_call.1} parent=43 // pred_check_branch
          %298 = sbr.rel (%p296) target = $region56
        $region55: #{tpu_custom_call.1} parent=43 // pred_region
          %299 = dma.done [#allocation6], 512
        $region56: #{tpu_custom_call.1} parent=43 // pred_fallthru
          _
        // Predicated region
        $region57: #{tpu_custom_call.1} parent=43 // pred_check
          %p300 = pneg %p137
        $region58: #{tpu_custom_call.1} parent=43 // pred_check_branch
          %302 = sbr.rel (%p300) target = $region60
        $region59: #{tpu_custom_call.1} parent=43 // pred_region
          %303 = dma.done [#allocation9], 512
        $region60: #{tpu_custom_call.1} parent=43 // pred_fallthru
          _
        %s304 = sand.u32 %s35, 1
        %s305 = scalar_lea.sflag [#allocation3], %s304
        %s306 = sand.u32 %s35, 1
        %s307 = smul.addr %s306, 8
        %s308 = scalar_lea.vmem [#allocation2], %s307
        %p309 = pneg %p48
        %p310 = pneg %p45
        %s311 = sand.u32 %s27, 1
        %s312 = scalar_lea.sflag [#allocation6], %s311
        %s313 = sand.u32 %s61, 1
        %s314 = smul.addr %s313, 8
        %s315 = scalar_lea.vmem [#allocation5], %s314
        %p316 = pneg %p74
        %p317 = pneg %p71
        %p318 = pneg %p95
        %p319 = pneg %p92
        %p320 = pneg %p116
        %p321 = pneg %p113
        %p322 = pneg %p137
        %p323 = pneg %p134
        %p324 = pneg %p158
        %p325 = pneg %p155
        %p326 = pneg %p184
        %p327 = pneg %p181
        %s328 = sand.u32 %s171, 1
        %s329 = scalar_lea.sflag [#allocation4], %s328
        %s330 = sand.u32 %s171, 1
        %s331 = smul.addr %s330, 8
        %s332 = scalar_lea.vmem [#allocation10], %s331
        %v333 = vld [vmem:[%s282] sm:$0xff]
        %v334 = vld [vmem:[#allocation7] sm:$0xff]
        %v335 = vld [vmem:[#allocation7 + $0x8] sm:$0xff]
        %v336 = vld [vmem:[#allocation7 + $0x10] sm:$0xff]
        %v337 = vld [vmem:[#allocation7 + $0x18] sm:$0xff]
        %v338 = vld [vmem:[%s3] sm:$0x1]
        %v340 = vlaneseq
        %v341 = vshrl.u32 %v340, 7
        %v342 = vsub.s32 0, %v341
        %v343 = vrot.slane %v338, %v342
        %vm345 = vcmask 261120
        %v347 = vsel %vm345, %v333, 0
        %349 = vmatprep.subr.mxu0 0.0
        %350 = vmatpush1.msra.mxu0 %v334
        %351 = vmatprep.subr.mxu0 0.0
        %352 = vmatpush1.msra.mxu0 %v335
        %353 = vmatprep.subr.mxu0 0.0
        %354 = vmatpush1.msra.mxu0 %v336
        %355 = vmatprep.subr.mxu0 0.0
        %356 = vmatpush1.msra.mxu0 %v337
        %357 = vmatprep.subr.mxu0 0.0
        %358 = vmatpush1.msra.mxu0 0.0
        %359 = vmatprep.subr.mxu0 0.0
        %360 = vmatpush1.msra.mxu0 0.0
        %361 = vmatprep.subr.mxu0 0.0
        %362 = vmatpush1.msra.mxu0 0.0
        %363 = vmatprep.subr.mxu0 0.0
        %364 = vmatpush1.msra.mxu0 0.0
        %365 = vmatprep.subr.mxu0 0.0
        %366 = vmatpush1.msra.mxu0 0.0
        %367 = vmatprep.subr.mxu0 0.0
        %368 = vmatpush1.msra.mxu0 0.0
        %369 = vmatprep.subr.mxu0 0.0
        %370 = vmatpush1.msra.mxu0 0.0
        %371 = vmatprep.subr.mxu0 0.0
        %372 = vmatpush1.msra.mxu0 0.0
        %373 = vmatprep.subr.mxu0 0.0
        %374 = vmatpush1.msra.mxu0 0.0
        %375 = vmatprep.subr.mxu0 0.0
        %376 = vmatpush1.msra.mxu0 0.0
        %377 = vmatprep.subr.mxu0 0.0
        %378 = vmatpush1.msra.mxu0 0.0
        %379 = vmatprep.subr.mxu0 0.0
        %380 = vmatpush1.msra.mxu0 0.0
        %381 = vmatprep.subr.mxu0 0.0
        %382 = vmatpush1.msra.mxu0 0.0
        %383 = vmatprep.subr.mxu0 0.0
        %384 = vmatpush1.msra.mxu0 0.0
        %385 = vmatprep.subr.mxu0 0.0
        %386 = vmatpush1.msra.mxu0 0.0
        %387 = vmatprep.subr.mxu0 0.0
        %388 = vmatpush1.msra.mxu0 0.0
        %389 = vmatprep.subr.mxu0 0.0
        %390 = vmatpush1.msra.mxu0 0.0
        %391 = vmatprep.subr.mxu0 0.0
        %392 = vmatpush1.msra.mxu0 0.0
        %393 = vmatprep.subr.mxu0 0.0
        %394 = vmatpush1.msra.mxu0 0.0
        %395 = vmatprep.subr.mxu0 0.0
        %396 = vmatpush1.msra.mxu0 0.0
        %397 = vmatprep.subr.mxu0 0.0
        %398 = vmatpush1.msra.mxu0 0.0
        %399 = vmatprep.subr.mxu0 0.0
        %400 = vmatpush1.msra.mxu0 0.0
        %401 = vmatprep.subr.mxu0 0.0
        %402 = vmatpush1.msra.mxu0 0.0
        %403 = vmatprep.subr.mxu0 0.0
        %404 = vmatpush1.msra.mxu0 0.0
        %405 = vmatprep.subr.mxu0 0.0
        %406 = vmatpush1.msra.mxu0 0.0
        %407 = vmatprep.subr.mxu0 0.0
        %408 = vmatpush1.msra.mxu0 0.0
        %409 = vmatprep.subr.mxu0 0.0
        %410 = vmatpush1.msra.mxu0 0.0
        %411 = vmatprep.subr.mxu0 0.0
        %412 = vmatpush1.msra.mxu0 0.0
        %413 = vmatprep.mubr.f32.mxu0 0.0
        %414 = vmatmul.mubr.f32.gmra.mrb[0].mxu0 %v347
        %v415 = vpop.f32.mrb[0].mxu0
        %v416 = vadd.f32 %v343, %v415
        %v417 = vpop.f32.mrb[0].mxu0
        %418 = vdwg.mxu0
        %v419 = vld [vmem:[%s291] sm:$0xff]
        %v420 = vld [vmem:[#allocation8] sm:$0xff]
        %v421 = vld [vmem:[#allocation8 + $0x8] sm:$0xff]
        %v422 = vld [vmem:[#allocation8 + $0x10] sm:$0xff]
        %v423 = vld [vmem:[#allocation8 + $0x18] sm:$0xff]
        %v424 = vld [vmem:[%s5] sm:$0x1]
        %v426 = vlaneseq
        %v427 = vshrl.u32 %v426, 7
        %v428 = vsub.s32 0, %v427
        %v429 = vrot.slane %v424, %v428
        %v432 = vsel %vm345, %v419, 0
        %434 = vmatprep.subr.mxu0 0.0
        %435 = vmatpush1.msra.mxu0 %v420
        %436 = vmatprep.subr.mxu0 0.0
        %437 = vmatpush1.msra.mxu0 %v421
        %438 = vmatprep.subr.mxu0 0.0
        %439 = vmatpush1.msra.mxu0 %v422
        %440 = vmatprep.subr.mxu0 0.0
        %441 = vmatpush1.msra.mxu0 %v423
        %442 = vmatprep.subr.mxu0 0.0
        %443 = vmatpush1.msra.mxu0 0.0
        %444 = vmatprep.subr.mxu0 0.0
        %445 = vmatpush1.msra.mxu0 0.0
        %446 = vmatprep.subr.mxu0 0.0
        %447 = vmatpush1.msra.mxu0 0.0
        %448 = vmatprep.subr.mxu0 0.0
        %449 = vmatpush1.msra.mxu0 0.0
        %450 = vmatprep.subr.mxu0 0.0
        %451 = vmatpush1.msra.mxu0 0.0
        %452 = vmatprep.subr.mxu0 0.0
        %453 = vmatpush1.msra.mxu0 0.0
        %454 = vmatprep.subr.mxu0 0.0
        %455 = vmatpush1.msra.mxu0 0.0
        %456 = vmatprep.subr.mxu0 0.0
        %457 = vmatpush1.msra.mxu0 0.0
        %458 = vmatprep.subr.mxu0 0.0
        %459 = vmatpush1.msra.mxu0 0.0
        %460 = vmatprep.subr.mxu0 0.0
        %461 = vmatpush1.msra.mxu0 0.0
        %462 = vmatprep.subr.mxu0 0.0
        %463 = vmatpush1.msra.mxu0 0.0
        %464 = vmatprep.subr.mxu0 0.0
        %465 = vmatpush1.msra.mxu0 0.0
        %466 = vmatprep.subr.mxu0 0.0
        %467 = vmatpush1.msra.mxu0 0.0
        %468 = vmatprep.subr.mxu0 0.0
        %469 = vmatpush1.msra.mxu0 0.0
        %470 = vmatprep.subr.mxu0 0.0
        %471 = vmatpush1.msra.mxu0 0.0
        %472 = vmatprep.subr.mxu0 0.0
        %473 = vmatpush1.msra.mxu0 0.0
        %474 = vmatprep.subr.mxu0 0.0
        %475 = vmatpush1.msra.mxu0 0.0
        %476 = vmatprep.subr.mxu0 0.0
        %477 = vmatpush1.msra.mxu0 0.0
        %478 = vmatprep.subr.mxu0 0.0
        %479 = vmatpush1.msra.mxu0 0.0
        %480 = vmatprep.subr.mxu0 0.0
        %481 = vmatpush1.msra.mxu0 0.0
        %482 = vmatprep.subr.mxu0 0.0
        %483 = vmatpush1.msra.mxu0 0.0
        %484 = vmatprep.subr.mxu0 0.0
        %485 = vmatpush1.msra.mxu0 0.0
        %486 = vmatprep.subr.mxu0 0.0
        %487 = vmatpush1.msra.mxu0 0.0
        %488 = vmatprep.subr.mxu0 0.0
        %489 = vmatpush1.msra.mxu0 0.0
        %490 = vmatprep.subr.mxu0 0.0
        %491 = vmatpush1.msra.mxu0 0.0
        %492 = vmatprep.subr.mxu0 0.0
        %493 = vmatpush1.msra.mxu0 0.0
        %494 = vmatprep.subr.mxu0 0.0
        %495 = vmatpush1.msra.mxu0 0.0
        %496 = vmatprep.subr.mxu0 0.0
        %497 = vmatpush1.msra.mxu0 0.0
        %498 = vmatprep.mubr.f32.mxu0 0.0
        %499 = vmatmul.mubr.f32.gmra.mrb[0].mxu0 %v432
        %v500 = vpop.f32.mrb[0].mxu0
        %v501 = vadd.f32 %v429, %v500
        %v502 = vpop.f32.mrb[0].mxu0
        %503 = vdwg.mxu0
        %vm504 = vcmask 64512
        %v506 = vsel %vm504, %v416, 0
        %v509 = vsel %vm504, %v501, 0
        %511 = vmatprep.subr.mxu0 0.0
        %512 = vmatpush1.xpose.msra.mxu0 %v509
        %513 = vmatprep.subr.mxu0 0.0
        %514 = vmatpush1.xpose.msra.mxu0 0.0
        %515 = vmatprep.subr.mxu0 0.0
        %516 = vmatpush1.xpose.msra.mxu0 0.0
        %517 = vmatprep.subr.mxu0 0.0
        %518 = vmatpush1.xpose.msra.mxu0 0.0
        %519 = vmatprep.subr.mxu0 0.0
        %520 = vmatpush1.xpose.msra.mxu0 0.0
        %521 = vmatprep.subr.mxu0 0.0
        %522 = vmatpush1.xpose.msra.mxu0 0.0
        %523 = vmatprep.subr.mxu0 0.0
        %524 = vmatpush1.xpose.msra.mxu0 0.0
        %525 = vmatprep.subr.mxu0 0.0
        %526 = vmatpush1.xpose.msra.mxu0 0.0
        %527 = vmatprep.subr.mxu0 0.0
        %528 = vmatpush1.xpose.msra.mxu0 0.0
        %529 = vmatprep.subr.mxu0 0.0
        %530 = vmatpush1.xpose.msra.mxu0 0.0
        %531 = vmatprep.subr.mxu0 0.0
        %532 = vmatpush1.xpose.msra.mxu0 0.0
        %533 = vmatprep.subr.mxu0 0.0
        %534 = vmatpush1.xpose.msra.mxu0 0.0
        %535 = vmatprep.subr.mxu0 0.0
        %536 = vmatpush1.xpose.msra.mxu0 0.0
        %537 = vmatprep.subr.mxu0 0.0
        %538 = vmatpush1.xpose.msra.mxu0 0.0
        %539 = vmatprep.subr.mxu0 0.0
        %540 = vmatpush1.xpose.msra.mxu0 0.0
        %541 = vmatprep.subr.mxu0 0.0
        %542 = vmatpush1.xpose.msra.mxu0 0.0
        %543 = vmatprep.subr.mxu0 0.0
        %544 = vmatpush1.xpose.msra.mxu0 0.0
        %545 = vmatprep.subr.mxu0 0.0
        %546 = vmatpush1.xpose.msra.mxu0 0.0
        %547 = vmatprep.subr.mxu0 0.0
        %548 = vmatpush1.xpose.msra.mxu0 0.0
        %549 = vmatprep.subr.mxu0 0.0
        %550 = vmatpush1.xpose.msra.mxu0 0.0
        %551 = vmatprep.subr.mxu0 0.0
        %552 = vmatpush1.xpose.msra.mxu0 0.0
        %553 = vmatprep.subr.mxu0 0.0
        %554 = vmatpush1.xpose.msra.mxu0 0.0
        %555 = vmatprep.subr.mxu0 0.0
        %556 = vmatpush1.xpose.msra.mxu0 0.0
        %557 = vmatprep.subr.mxu0 0.0
        %558 = vmatpush1.xpose.msra.mxu0 0.0
        %559 = vmatprep.subr.mxu0 0.0
        %560 = vmatpush1.xpose.msra.mxu0 0.0
        %561 = vmatprep.subr.mxu0 0.0
        %562 = vmatpush1.xpose.msra.mxu0 0.0
        %563 = vmatprep.subr.mxu0 0.0
        %564 = vmatpush1.xpose.msra.mxu0 0.0
        %565 = vmatprep.subr.mxu0 0.0
        %566 = vmatpush1.xpose.msra.mxu0 0.0
        %567 = vmatprep.subr.mxu0 0.0
        %568 = vmatpush1.xpose.msra.mxu0 0.0
        %569 = vmatprep.subr.mxu0 0.0
        %570 = vmatpush1.xpose.msra.mxu0 0.0
        %571 = vmatprep.subr.mxu0 0.0
        %572 = vmatpush1.xpose.msra.mxu0 0.0
        %573 = vmatprep.subr.mxu0 0.0
        %574 = vmatpush1.xpose.msra.mxu0 0.0
        %575 = vmatprep.mubr.f32.mxu0 0.0
        %576 = vmatmul.mubr.f32.gmra.mrb[0].mxu0 %v506
        %v577 = vpop.f32.mrb[0].mxu0
        %v578 = vadd.f32 0.0, %v577
        %v579 = vpop.f32.mrb[0].mxu0
        %580 = vdwg.mxu0
        %v581 = vmul.f32 %v578, 0.35355338
        %v582 = vsel %vm504, %v581, -inf
        %583 = vmax.xlane.f32.xlu0 %v582
        %v584 = vpop.xlane.xlu0 %583
        %v585 = vsub.f32 %v581, %v584
        %v586 = vmul.f32 %v585, 1.442695
        %v587 = vpow.pop %v586
        %v588 = vsel %vm504, %v587, 0.0
        %589 = vadd.xlane.f32.xlu0 %v588
        %v590 = vpop.xlane.xlu0 %589
        %v591 = vrcp.pop %v590
        %v592 = vmul.f32 %v587, %v591
        %593 = vrot.lane.b32.xlu0 %v501, 96
        %v594 = vpop.permute.xlu0 %593
        %v597 = vsel %vm504, %v592, 0
        %599 = vmatprep.subr.mxu0 0.0
        %600 = vmatpush1.msra.mxu0 %v594
        %601 = vmatprep.subr.mxu0 0.0
        %602 = vmatpush1.msra.mxu0 0.0
        %603 = vmatprep.subr.mxu0 0.0
        %604 = vmatpush1.msra.mxu0 0.0
        %605 = vmatprep.subr.mxu0 0.0
        %606 = vmatpush1.msra.mxu0 0.0
        %607 = vmatprep.subr.mxu0 0.0
        %608 = vmatpush1.msra.mxu0 0.0
        %609 = vmatprep.subr.mxu0 0.0
        %610 = vmatpush1.msra.mxu0 0.0
        %611 = vmatprep.subr.mxu0 0.0
        %612 = vmatpush1.msra.mxu0 0.0
        %613 = vmatprep.subr.mxu0 0.0
        %614 = vmatpush1.msra.mxu0 0.0
        %615 = vmatprep.subr.mxu0 0.0
        %616 = vmatpush1.msra.mxu0 0.0
        %617 = vmatprep.subr.mxu0 0.0
        %618 = vmatpush1.msra.mxu0 0.0
        %619 = vmatprep.subr.mxu0 0.0
        %620 = vmatpush1.msra.mxu0 0.0
        %621 = vmatprep.subr.mxu0 0.0
        %622 = vmatpush1.msra.mxu0 0.0
        %623 = vmatprep.subr.mxu0 0.0
        %624 = vmatpush1.msra.mxu0 0.0
        %625 = vmatprep.subr.mxu0 0.0
        %626 = vmatpush1.msra.mxu0 0.0
        %627 = vmatprep.subr.mxu0 0.0
        %628 = vmatpush1.msra.mxu0 0.0
        %629 = vmatprep.subr.mxu0 0.0
        %630 = vmatpush1.msra.mxu0 0.0
        %631 = vmatprep.subr.mxu0 0.0
        %632 = vmatpush1.msra.mxu0 0.0
        %633 = vmatprep.subr.mxu0 0.0
        %634 = vmatpush1.msra.mxu0 0.0
        %635 = vmatprep.subr.mxu0 0.0
        %636 = vmatpush1.msra.mxu0 0.0
        %637 = vmatprep.subr.mxu0 0.0
        %638 = vmatpush1.msra.mxu0 0.0
        %639 = vmatprep.subr.mxu0 0.0
        %640 = vmatpush1.msra.mxu0 0.0
        %641 = vmatprep.subr.mxu0 0.0
        %642 = vmatpush1.msra.mxu0 0.0
        %643 = vmatprep.subr.mxu0 0.0
        %644 = vmatpush1.msra.mxu0 0.0
        %645 = vmatprep.subr.mxu0 0.0
        %646 = vmatpush1.msra.mxu0 0.0
        %647 = vmatprep.subr.mxu0 0.0
        %648 = vmatpush1.msra.mxu0 0.0
        %649 = vmatprep.subr.mxu0 0.0
        %650 = vmatpush1.msra.mxu0 0.0
        %651 = vmatprep.subr.mxu0 0.0
        %652 = vmatpush1.msra.mxu0 0.0
        %653 = vmatprep.subr.mxu0 0.0
        %654 = vmatpush1.msra.mxu0 0.0
        %655 = vmatprep.subr.mxu0 0.0
        %656 = vmatpush1.msra.mxu0 0.0
        %657 = vmatprep.subr.mxu0 0.0
        %658 = vmatpush1.msra.mxu0 0.0
        %659 = vmatprep.subr.mxu0 0.0
        %660 = vmatpush1.msra.mxu0 0.0
        %661 = vmatprep.subr.mxu0 0.0
        %662 = vmatpush1.msra.mxu0 0.0
        %663 = vmatprep.mubr.f32.mxu0 0.0
        %664 = vmatmul.mubr.f32.gmra.mrb[0].mxu0 %v597
        %v665 = vpop.f32.mrb[0].mxu0
        %v666 = vadd.f32 0.0, %v665
        %v667 = vpop.f32.mrb[0].mxu0
        %668 = vdwg.mxu0
        %669 = vrot.lane.b32.xlu0 %v416, 120
        %v670 = vpop.permute.xlu0 %669
        %671 = vrot.lane.b32.xlu0 %v501, 120
        %v672 = vpop.permute.xlu0 %671
        %v673 = vsel %vm504, %v670, 0
        %v675 = vsel %vm504, %v672, 0
        %677 = vmatprep.subr.mxu0 0.0
        %678 = vmatpush1.xpose.msra.mxu0 %v675
        %679 = vmatprep.subr.mxu0 0.0
        %680 = vmatpush1.xpose.msra.mxu0 0.0
        %681 = vmatprep.subr.mxu0 0.0
        %682 = vmatpush1.xpose.msra.mxu0 0.0
        %683 = vmatprep.subr.mxu0 0.0
        %684 = vmatpush1.xpose.msra.mxu0 0.0
        %685 = vmatprep.subr.mxu0 0.0
        %686 = vmatpush1.xpose.msra.mxu0 0.0
        %687 = vmatprep.subr.mxu0 0.0
        %688 = vmatpush1.xpose.msra.mxu0 0.0
        %689 = vmatprep.subr.mxu0 0.0
        %690 = vmatpush1.xpose.msra.mxu0 0.0
        %691 = vmatprep.subr.mxu0 0.0
        %692 = vmatpush1.xpose.msra.mxu0 0.0
        %693 = vmatprep.subr.mxu0 0.0
        %694 = vmatpush1.xpose.msra.mxu0 0.0
        %695 = vmatprep.subr.mxu0 0.0
        %696 = vmatpush1.xpose.msra.mxu0 0.0
        %697 = vmatprep.subr.mxu0 0.0
        %698 = vmatpush1.xpose.msra.mxu0 0.0
        %699 = vmatprep.subr.mxu0 0.0
        %700 = vmatpush1.xpose.msra.mxu0 0.0
        %701 = vmatprep.subr.mxu0 0.0
        %702 = vmatpush1.xpose.msra.mxu0 0.0
        %703 = vmatprep.subr.mxu0 0.0
        %704 = vmatpush1.xpose.msra.mxu0 0.0
        %705 = vmatprep.subr.mxu0 0.0
        %706 = vmatpush1.xpose.msra.mxu0 0.0
        %707 = vmatprep.subr.mxu0 0.0
        %708 = vmatpush1.xpose.msra.mxu0 0.0
        %709 = vmatprep.subr.mxu0 0.0
        %710 = vmatpush1.xpose.msra.mxu0 0.0
        %711 = vmatprep.subr.mxu0 0.0
        %712 = vmatpush1.xpose.msra.mxu0 0.0
        %713 = vmatprep.subr.mxu0 0.0
        %714 = vmatpush1.xpose.msra.mxu0 0.0
        %715 = vmatprep.subr.mxu0 0.0
        %716 = vmatpush1.xpose.msra.mxu0 0.0
        %717 = vmatprep.subr.mxu0 0.0
        %718 = vmatpush1.xpose.msra.mxu0 0.0
        %719 = vmatprep.subr.mxu0 0.0
        %720 = vmatpush1.xpose.msra.mxu0 0.0
        %721 = vmatprep.subr.mxu0 0.0
        %722 = vmatpush1.xpose.msra.mxu0 0.0
        %723 = vmatprep.subr.mxu0 0.0
        %724 = vmatpush1.xpose.msra.mxu0 0.0
        %725 = vmatprep.subr.mxu0 0.0
        %726 = vmatpush1.xpose.msra.mxu0 0.0
        %727 = vmatprep.subr.mxu0 0.0
        %728 = vmatpush1.xpose.msra.mxu0 0.0
        %729 = vmatprep.subr.mxu0 0.0
        %730 = vmatpush1.xpose.msra.mxu0 0.0
        %731 = vmatprep.subr.mxu0 0.0
        %732 = vmatpush1.xpose.msra.mxu0 0.0
        %733 = vmatprep.subr.mxu0 0.0
        %734 = vmatpush1.xpose.msra.mxu0 0.0
        %735 = vmatprep.subr.mxu0 0.0
        %736 = vmatpush1.xpose.msra.mxu0 0.0
        %737 = vmatprep.subr.mxu0 0.0
        %738 = vmatpush1.xpose.msra.mxu0 0.0
        %739 = vmatprep.subr.mxu0 0.0
        %740 = vmatpush1.xpose.msra.mxu0 0.0
        %741 = vmatprep.mubr.f32.mxu0 0.0
        %742 = vmatmul.mubr.f32.gmra.mrb[0].mxu0 %v673
        %v743 = vpop.f32.mrb[0].mxu0
        %v744 = vadd.f32 0.0, %v743
        %v745 = vpop.f32.mrb[0].mxu0
        %746 = vdwg.mxu0
        %v747 = vmul.f32 %v744, 0.35355338
        %v748 = vsel %vm504, %v747, -inf
        %749 = vmax.xlane.f32.xlu0 %v748
        %v750 = vpop.xlane.xlu0 %749
        %v751 = vsub.f32 %v747, %v750
        %v752 = vmul.f32 %v751, 1.442695
        %v753 = vpow.pop %v752
        %v754 = vsel %vm504, %v753, 0.0
        %755 = vadd.xlane.f32.xlu0 %v754
        %v756 = vpop.xlane.xlu0 %755
        %v757 = vrcp.pop %v756
        %v758 = vmul.f32 %v753, %v757
        %759 = vrot.lane.b32.xlu0 %v501, 88
        %v760 = vpop.permute.xlu0 %759
        %v763 = vsel %vm504, %v758, 0
        %765 = vmatprep.subr.mxu0 0.0
        %766 = vmatpush1.msra.mxu0 %v760
        %767 = vmatprep.subr.mxu0 0.0
        %768 = vmatpush1.msra.mxu0 0.0
        %769 = vmatprep.subr.mxu0 0.0
        %770 = vmatpush1.msra.mxu0 0.0
        %771 = vmatprep.subr.mxu0 0.0
        %772 = vmatpush1.msra.mxu0 0.0
        %773 = vmatprep.subr.mxu0 0.0
        %774 = vmatpush1.msra.mxu0 0.0
        %775 = vmatprep.subr.mxu0 0.0
        %776 = vmatpush1.msra.mxu0 0.0
        %777 = vmatprep.subr.mxu0 0.0
        %778 = vmatpush1.msra.mxu0 0.0
        %779 = vmatprep.subr.mxu0 0.0
        %780 = vmatpush1.msra.mxu0 0.0
        %781 = vmatprep.subr.mxu0 0.0
        %782 = vmatpush1.msra.mxu0 0.0
        %783 = vmatprep.subr.mxu0 0.0
        %784 = vmatpush1.msra.mxu0 0.0
        %785 = vmatprep.subr.mxu0 0.0
        %786 = vmatpush1.msra.mxu0 0.0
        %787 = vmatprep.subr.mxu0 0.0
        %788 = vmatpush1.msra.mxu0 0.0
        %789 = vmatprep.subr.mxu0 0.0
        %790 = vmatpush1.msra.mxu0 0.0
        %791 = vmatprep.subr.mxu0 0.0
        %792 = vmatpush1.msra.mxu0 0.0
        %793 = vmatprep.subr.mxu0 0.0
        %794 = vmatpush1.msra.mxu0 0.0
        %795 = vmatprep.subr.mxu0 0.0
        %796 = vmatpush1.msra.mxu0 0.0
        %797 = vmatprep.subr.mxu0 0.0
        %798 = vmatpush1.msra.mxu0 0.0
        %799 = vmatprep.subr.mxu0 0.0
        %800 = vmatpush1.msra.mxu0 0.0
        %801 = vmatprep.subr.mxu0 0.0
        %802 = vmatpush1.msra.mxu0 0.0
        %803 = vmatprep.subr.mxu0 0.0
        %804 = vmatpush1.msra.mxu0 0.0
        %805 = vmatprep.subr.mxu0 0.0
        %806 = vmatpush1.msra.mxu0 0.0
        %807 = vmatprep.subr.mxu0 0.0
        %808 = vmatpush1.msra.mxu0 0.0
        %809 = vmatprep.subr.mxu0 0.0
        %810 = vmatpush1.msra.mxu0 0.0
        %811 = vmatprep.subr.mxu0 0.0
        %812 = vmatpush1.msra.mxu0 0.0
        %813 = vmatprep.subr.mxu0 0.0
        %814 = vmatpush1.msra.mxu0 0.0
        %815 = vmatprep.subr.mxu0 0.0
        %816 = vmatpush1.msra.mxu0 0.0
        %817 = vmatprep.subr.mxu0 0.0
        %818 = vmatpush1.msra.mxu0 0.0
        %819 = vmatprep.subr.mxu0 0.0
        %820 = vmatpush1.msra.mxu0 0.0
        %821 = vmatprep.subr.mxu0 0.0
        %822 = vmatpush1.msra.mxu0 0.0
        %823 = vmatprep.subr.mxu0 0.0
        %824 = vmatpush1.msra.mxu0 0.0
        %825 = vmatprep.subr.mxu0 0.0
        %826 = vmatpush1.msra.mxu0 0.0
        %827 = vmatprep.subr.mxu0 0.0
        %828 = vmatpush1.msra.mxu0 0.0
        %829 = vmatprep.mubr.f32.mxu0 0.0
        %830 = vmatmul.mubr.f32.gmra.mrb[0].mxu0 %v763
        %v831 = vpop.f32.mrb[0].mxu0
        %v832 = vadd.f32 0.0, %v831
        %v833 = vpop.f32.mrb[0].mxu0
        %834 = vdwg.mxu0
        %835 = vrot.lane.b32.xlu0 %v416, 112
        %v836 = vpop.permute.xlu0 %835
        %837 = vrot.lane.b32.xlu0 %v501, 112
        %v838 = vpop.permute.xlu0 %837
        %v839 = vsel %vm504, %v836, 0
        %v841 = vsel %vm504, %v838, 0
        %843 = vmatprep.subr.mxu0 0.0
        %844 = vmatpush1.xpose.msra.mxu0 %v841
        %845 = vmatprep.subr.mxu0 0.0
        %846 = vmatpush1.xpose.msra.mxu0 0.0
        %847 = vmatprep.subr.mxu0 0.0
        %848 = vmatpush1.xpose.msra.mxu0 0.0
        %849 = vmatprep.subr.mxu0 0.0
        %850 = vmatpush1.xpose.msra.mxu0 0.0
        %851 = vmatprep.subr.mxu0 0.0
        %852 = vmatpush1.xpose.msra.mxu0 0.0
        %853 = vmatprep.subr.mxu0 0.0
        %854 = vmatpush1.xpose.msra.mxu0 0.0
        %855 = vmatprep.subr.mxu0 0.0
        %856 = vmatpush1.xpose.msra.mxu0 0.0
        %857 = vmatprep.subr.mxu0 0.0
        %858 = vmatpush1.xpose.msra.mxu0 0.0
        %859 = vmatprep.subr.mxu0 0.0
        %860 = vmatpush1.xpose.msra.mxu0 0.0
        %861 = vmatprep.subr.mxu0 0.0
        %862 = vmatpush1.xpose.msra.mxu0 0.0
        %863 = vmatprep.subr.mxu0 0.0
        %864 = vmatpush1.xpose.msra.mxu0 0.0
        %865 = vmatprep.subr.mxu0 0.0
        %866 = vmatpush1.xpose.msra.mxu0 0.0
        %867 = vmatprep.subr.mxu0 0.0
        %868 = vmatpush1.xpose.msra.mxu0 0.0
        %869 = vmatprep.subr.mxu0 0.0
        %870 = vmatpush1.xpose.msra.mxu0 0.0
        %871 = vmatprep.subr.mxu0 0.0
        %872 = vmatpush1.xpose.msra.mxu0 0.0
        %873 = vmatprep.subr.mxu0 0.0
        %874 = vmatpush1.xpose.msra.mxu0 0.0
        %875 = vmatprep.subr.mxu0 0.0
        %876 = vmatpush1.xpose.msra.mxu0 0.0
        %877 = vmatprep.subr.mxu0 0.0
        %878 = vmatpush1.xpose.msra.mxu0 0.0
        %879 = vmatprep.subr.mxu0 0.0
        %880 = vmatpush1.xpose.msra.mxu0 0.0
        %881 = vmatprep.subr.mxu0 0.0
        %882 = vmatpush1.xpose.msra.mxu0 0.0
        %883 = vmatprep.subr.mxu0 0.0
        %884 = vmatpush1.xpose.msra.mxu0 0.0
        %885 = vmatprep.subr.mxu0 0.0
        %886 = vmatpush1.xpose.msra.mxu0 0.0
        %887 = vmatprep.subr.mxu0 0.0
        %888 = vmatpush1.xpose.msra.mxu0 0.0
        %889 = vmatprep.subr.mxu0 0.0
        %890 = vmatpush1.xpose.msra.mxu0 0.0
        %891 = vmatprep.subr.mxu0 0.0
        %892 = vmatpush1.xpose.msra.mxu0 0.0
        %893 = vmatprep.subr.mxu0 0.0
        %894 = vmatpush1.xpose.msra.mxu0 0.0
        %895 = vmatprep.subr.mxu0 0.0
        %896 = vmatpush1.xpose.msra.mxu0 0.0
        %897 = vmatprep.subr.mxu0 0.0
        %898 = vmatpush1.xpose.msra.mxu0 0.0
        %899 = vmatprep.subr.mxu0 0.0
        %900 = vmatpush1.xpose.msra.mxu0 0.0
        %901 = vmatprep.subr.mxu0 0.0
        %902 = vmatpush1.xpose.msra.mxu0 0.0
        %903 = vmatprep.subr.mxu0 0.0
        %904 = vmatpush1.xpose.msra.mxu0 0.0
        %905 = vmatprep.subr.mxu0 0.0
        %906 = vmatpush1.xpose.msra.mxu0 0.0
        %907 = vmatprep.mubr.f32.mxu0 0.0
        %908 = vmatmul.mubr.f32.gmra.mrb[0].mxu0 %v839
        %v909 = vpop.f32.mrb[0].mxu0
        %v910 = vadd.f32 0.0, %v909
        %v911 = vpop.f32.mrb[0].mxu0
        %912 = vdwg.mxu0
        %v913 = vmul.f32 %v910, 0.35355338
        %v914 = vsel %vm504, %v913, -inf
        %915 = vmax.xlane.f32.xlu0 %v914
        %v916 = vpop.xlane.xlu0 %915
        %v917 = vsub.f32 %v913, %v916
        %v918 = vmul.f32 %v917, 1.442695
        %v919 = vpow.pop %v918
        %v920 = vsel %vm504, %v919, 0.0
        %921 = vadd.xlane.f32.xlu0 %v920
        %v922 = vpop.xlane.xlu0 %921
        %v923 = vrcp.pop %v922
        %v924 = vmul.f32 %v919, %v923
        %925 = vrot.lane.b32.xlu0 %v501, 80
        %v926 = vpop.permute.xlu0 %925
        %v929 = vsel %vm504, %v924, 0
        %931 = vmatprep.subr.mxu0 0.0
        %932 = vmatpush1.msra.mxu0 %v926
        %933 = vmatprep.subr.mxu0 0.0
        %934 = vmatpush1.msra.mxu0 0.0
        %935 = vmatprep.subr.mxu0 0.0
        %936 = vmatpush1.msra.mxu0 0.0
        %937 = vmatprep.subr.mxu0 0.0
        %938 = vmatpush1.msra.mxu0 0.0
        %939 = vmatprep.subr.mxu0 0.0
        %940 = vmatpush1.msra.mxu0 0.0
        %941 = vmatprep.subr.mxu0 0.0
        %942 = vmatpush1.msra.mxu0 0.0
        %943 = vmatprep.subr.mxu0 0.0
        %944 = vmatpush1.msra.mxu0 0.0
        %945 = vmatprep.subr.mxu0 0.0
        %946 = vmatpush1.msra.mxu0 0.0
        %947 = vmatprep.subr.mxu0 0.0
        %948 = vmatpush1.msra.mxu0 0.0
        %949 = vmatprep.subr.mxu0 0.0
        %950 = vmatpush1.msra.mxu0 0.0
        %951 = vmatprep.subr.mxu0 0.0
        %952 = vmatpush1.msra.mxu0 0.0
        %953 = vmatprep.subr.mxu0 0.0
        %954 = vmatpush1.msra.mxu0 0.0
        %955 = vmatprep.subr.mxu0 0.0
        %956 = vmatpush1.msra.mxu0 0.0
        %957 = vmatprep.subr.mxu0 0.0
        %958 = vmatpush1.msra.mxu0 0.0
        %959 = vmatprep.subr.mxu0 0.0
        %960 = vmatpush1.msra.mxu0 0.0
        %961 = vmatprep.subr.mxu0 0.0
        %962 = vmatpush1.msra.mxu0 0.0
        %963 = vmatprep.subr.mxu0 0.0
        %964 = vmatpush1.msra.mxu0 0.0
        %965 = vmatprep.subr.mxu0 0.0
        %966 = vmatpush1.msra.mxu0 0.0
        %967 = vmatprep.subr.mxu0 0.0
        %968 = vmatpush1.msra.mxu0 0.0
        %969 = vmatprep.subr.mxu0 0.0
        %970 = vmatpush1.msra.mxu0 0.0
        %971 = vmatprep.subr.mxu0 0.0
        %972 = vmatpush1.msra.mxu0 0.0
        %973 = vmatprep.subr.mxu0 0.0
        %974 = vmatpush1.msra.mxu0 0.0
        %975 = vmatprep.subr.mxu0 0.0
        %976 = vmatpush1.msra.mxu0 0.0
        %977 = vmatprep.subr.mxu0 0.0
        %978 = vmatpush1.msra.mxu0 0.0
        %979 = vmatprep.subr.mxu0 0.0
        %980 = vmatpush1.msra.mxu0 0.0
        %981 = vmatprep.subr.mxu0 0.0
        %982 = vmatpush1.msra.mxu0 0.0
        %983 = vmatprep.subr.mxu0 0.0
        %984 = vmatpush1.msra.mxu0 0.0
        %985 = vmatprep.subr.mxu0 0.0
        %986 = vmatpush1.msra.mxu0 0.0
        %987 = vmatprep.subr.mxu0 0.0
        %988 = vmatpush1.msra.mxu0 0.0
        %989 = vmatprep.subr.mxu0 0.0
        %990 = vmatpush1.msra.mxu0 0.0
        %991 = vmatprep.subr.mxu0 0.0
        %992 = vmatpush1.msra.mxu0 0.0
        %993 = vmatprep.subr.mxu0 0.0
        %994 = vmatpush1.msra.mxu0 0.0
        %995 = vmatprep.mubr.f32.mxu0 0.0
        %996 = vmatmul.mubr.f32.gmra.mrb[0].mxu0 %v929
        %v997 = vpop.f32.mrb[0].mxu0
        %v998 = vadd.f32 0.0, %v997
        %v999 = vpop.f32.mrb[0].mxu0
        %1000 = vdwg.mxu0
        %1001 = vrot.lane.b32.xlu0 %v416, 104
        %v1002 = vpop.permute.xlu0 %1001
        %1003 = vrot.lane.b32.xlu0 %v501, 104
        %v1004 = vpop.permute.xlu0 %1003
        %v1005 = vsel %vm504, %v1002, 0
        %v1007 = vsel %vm504, %v1004, 0
        %1009 = vmatprep.subr.mxu0 0.0
        %1010 = vmatpush1.xpose.msra.mxu0 %v1007
        %1011 = vmatprep.subr.mxu0 0.0
        %1012 = vmatpush1.xpose.msra.mxu0 0.0
        %1013 = vmatprep.subr.mxu0 0.0
        %1014 = vmatpush1.xpose.msra.mxu0 0.0
        %1015 = vmatprep.subr.mxu0 0.0
        %1016 = vmatpush1.xpose.msra.mxu0 0.0
        %1017 = vmatprep.subr.mxu0 0.0
        %1018 = vmatpush1.xpose.msra.mxu0 0.0
        %1019 = vmatprep.subr.mxu0 0.0
        %1020 = vmatpush1.xpose.msra.mxu0 0.0
        %1021 = vmatprep.subr.mxu0 0.0
        %1022 = vmatpush1.xpose.msra.mxu0 0.0
        %1023 = vmatprep.subr.mxu0 0.0
        %1024 = vmatpush1.xpose.msra.mxu0 0.0
        %1025 = vmatprep.subr.mxu0 0.0
        %1026 = vmatpush1.xpose.msra.mxu0 0.0
        %1027 = vmatprep.subr.mxu0 0.0
        %1028 = vmatpush1.xpose.msra.mxu0 0.0
        %1029 = vmatprep.subr.mxu0 0.0
        %1030 = vmatpush1.xpose.msra.mxu0 0.0
        %1031 = vmatprep.subr.mxu0 0.0
        %1032 = vmatpush1.xpose.msra.mxu0 0.0
        %1033 = vmatprep.subr.mxu0 0.0
        %1034 = vmatpush1.xpose.msra.mxu0 0.0
        %1035 = vmatprep.subr.mxu0 0.0
        %1036 = vmatpush1.xpose.msra.mxu0 0.0
        %1037 = vmatprep.subr.mxu0 0.0
        %1038 = vmatpush1.xpose.msra.mxu0 0.0
        %1039 = vmatprep.subr.mxu0 0.0
        %1040 = vmatpush1.xpose.msra.mxu0 0.0
        %1041 = vmatprep.subr.mxu0 0.0
        %1042 = vmatpush1.xpose.msra.mxu0 0.0
        %1043 = vmatprep.subr.mxu0 0.0
        %1044 = vmatpush1.xpose.msra.mxu0 0.0
        %1045 = vmatprep.subr.mxu0 0.0
        %1046 = vmatpush1.xpose.msra.mxu0 0.0
        %1047 = vmatprep.subr.mxu0 0.0
        %1048 = vmatpush1.xpose.msra.mxu0 0.0
        %1049 = vmatprep.subr.mxu0 0.0
        %1050 = vmatpush1.xpose.msra.mxu0 0.0
        %1051 = vmatprep.subr.mxu0 0.0
        %1052 = vmatpush1.xpose.msra.mxu0 0.0
        %1053 = vmatprep.subr.mxu0 0.0
        %1054 = vmatpush1.xpose.msra.mxu0 0.0
        %1055 = vmatprep.subr.mxu0 0.0
        %1056 = vmatpush1.xpose.msra.mxu0 0.0
        %1057 = vmatprep.subr.mxu0 0.0
        %1058 = vmatpush1.xpose.msra.mxu0 0.0
        %1059 = vmatprep.subr.mxu0 0.0
        %1060 = vmatpush1.xpose.msra.mxu0 0.0
        %1061 = vmatprep.subr.mxu0 0.0
        %1062 = vmatpush1.xpose.msra.mxu0 0.0
        %1063 = vmatprep.subr.mxu0 0.0
        %1064 = vmatpush1.xpose.msra.mxu0 0.0
        %1065 = vmatprep.subr.mxu0 0.0
        %1066 = vmatpush1.xpose.msra.mxu0 0.0
        %1067 = vmatprep.subr.mxu0 0.0
        %1068 = vmatpush1.xpose.msra.mxu0 0.0
        %1069 = vmatprep.subr.mxu0 0.0
        %1070 = vmatpush1.xpose.msra.mxu0 0.0
        %1071 = vmatprep.subr.mxu0 0.0
        %1072 = vmatpush1.xpose.msra.mxu0 0.0
        %1073 = vmatprep.mubr.f32.mxu0 0.0
        %1074 = vmatmul.mubr.f32.gmra.mrb[0].mxu0 %v1005
        %v1075 = vpop.f32.mrb[0].mxu0
        %v1076 = vadd.f32 0.0, %v1075
        %v1077 = vpop.f32.mrb[0].mxu0
        %1078 = vdwg.mxu0
        %v1079 = vmul.f32 %v1076, 0.35355338
        %v1080 = vsel %vm504, %v1079, -inf
        %1081 = vmax.xlane.f32.xlu0 %v1080
        %v1082 = vpop.xlane.xlu0 %1081
        %v1083 = vsub.f32 %v1079, %v1082
        %v1084 = vmul.f32 %v1083, 1.442695
        %v1085 = vpow.pop %v1084
        %v1086 = vsel %vm504, %v1085, 0.0
        %1087 = vadd.xlane.f32.xlu0 %v1086
        %v1088 = vpop.xlane.xlu0 %1087
        %v1089 = vrcp.pop %v1088
        %v1090 = vmul.f32 %v1085, %v1089
        %1091 = vrot.lane.b32.xlu0 %v501, 72
        %v1092 = vpop.permute.xlu0 %1091
        %v1095 = vsel %vm504, %v1090, 0
        %1097 = vmatprep.subr.mxu0 0.0
        %1098 = vmatpush1.msra.mxu0 %v1092
        %1099 = vmatprep.subr.mxu0 0.0
        %1100 = vmatpush1.msra.mxu0 0.0
        %1101 = vmatprep.subr.mxu0 0.0
        %1102 = vmatpush1.msra.mxu0 0.0
        %1103 = vmatprep.subr.mxu0 0.0
        %1104 = vmatpush1.msra.mxu0 0.0
        %1105 = vmatprep.subr.mxu0 0.0
        %1106 = vmatpush1.msra.mxu0 0.0
        %1107 = vmatprep.subr.mxu0 0.0
        %1108 = vmatpush1.msra.mxu0 0.0
        %1109 = vmatprep.subr.mxu0 0.0
        %1110 = vmatpush1.msra.mxu0 0.0
        %1111 = vmatprep.subr.mxu0 0.0
        %1112 = vmatpush1.msra.mxu0 0.0
        %1113 = vmatprep.subr.mxu0 0.0
        %1114 = vmatpush1.msra.mxu0 0.0
        %1115 = vmatprep.subr.mxu0 0.0
        %1116 = vmatpush1.msra.mxu0 0.0
        %1117 = vmatprep.subr.mxu0 0.0
        %1118 = vmatpush1.msra.mxu0 0.0
        %1119 = vmatprep.subr.mxu0 0.0
        %1120 = vmatpush1.msra.mxu0 0.0
        %1121 = vmatprep.subr.mxu0 0.0
        %1122 = vmatpush1.msra.mxu0 0.0
        %1123 = vmatprep.subr.mxu0 0.0
        %1124 = vmatpush1.msra.mxu0 0.0
        %1125 = vmatprep.subr.mxu0 0.0
        %1126 = vmatpush1.msra.mxu0 0.0
        %1127 = vmatprep.subr.mxu0 0.0
        %1128 = vmatpush1.msra.mxu0 0.0
        %1129 = vmatprep.subr.mxu0 0.0
        %1130 = vmatpush1.msra.mxu0 0.0
        %1131 = vmatprep.subr.mxu0 0.0
        %1132 = vmatpush1.msra.mxu0 0.0
        %1133 = vmatprep.subr.mxu0 0.0
        %1134 = vmatpush1.msra.mxu0 0.0
        %1135 = vmatprep.subr.mxu0 0.0
        %1136 = vmatpush1.msra.mxu0 0.0
        %1137 = vmatprep.subr.mxu0 0.0
        %1138 = vmatpush1.msra.mxu0 0.0
        %1139 = vmatprep.subr.mxu0 0.0
        %1140 = vmatpush1.msra.mxu0 0.0
        %1141 = vmatprep.subr.mxu0 0.0
        %1142 = vmatpush1.msra.mxu0 0.0
        %1143 = vmatprep.subr.mxu0 0.0
        %1144 = vmatpush1.msra.mxu0 0.0
        %1145 = vmatprep.subr.mxu0 0.0
        %1146 = vmatpush1.msra.mxu0 0.0
        %1147 = vmatprep.subr.mxu0 0.0
        %1148 = vmatpush1.msra.mxu0 0.0
        %1149 = vmatprep.subr.mxu0 0.0
        %1150 = vmatpush1.msra.mxu0 0.0
        %1151 = vmatprep.subr.mxu0 0.0
        %1152 = vmatpush1.msra.mxu0 0.0
        %1153 = vmatprep.subr.mxu0 0.0
        %1154 = vmatpush1.msra.mxu0 0.0
        %1155 = vmatprep.subr.mxu0 0.0
        %1156 = vmatpush1.msra.mxu0 0.0
        %1157 = vmatprep.subr.mxu0 0.0
        %1158 = vmatpush1.msra.mxu0 0.0
        %1159 = vmatprep.subr.mxu0 0.0
        %1160 = vmatpush1.msra.mxu0 0.0
        %1161 = vmatprep.mubr.f32.mxu0 0.0
        %1162 = vmatmul.mubr.f32.gmra.mrb[0].mxu0 %v1095
        %v1163 = vpop.f32.mrb[0].mxu0
        %v1164 = vadd.f32 0.0, %v1163
        %v1165 = vpop.f32.mrb[0].mxu0
        %1166 = vdwg.mxu0
        %1168 = vrot.lane.b32.xlu0 %v832, 8
        %v1169 = vpop.permute.xlu0 %1168
        %1172 = vrot.lane.b32.xlu0 %v998, 16
        %v1173 = vpop.permute.xlu0 %1172
        %1176 = vrot.lane.b32.xlu0 %v1164, 24
        %v1177 = vpop.permute.xlu0 %1176
        %v1179 = vsel %vm504, %v666, %v1169
        %vm1180 = vcmask 130048
        %v1181 = vsel %vm1180, %v1179, %v1173
        %vm1182 = vcmask 195584
        %v1183 = vsel %vm1182, %v1181, %v1177
        %1184 = vst.msk [vmem:[%s332] sm:$0xff] %vm345, %v1183
        %s1185 = sand.u32 %s171, 1
        %s1186 = scalar_lea.sflag [#allocation4], %s1185
        %s1187 = sand.u32 %s171, 1
        %s1188 = smul.addr %s1187, 8
        %s1189 = scalar_lea.vmem [#allocation10], %s1188
        // Predicated region
        $region61: #{tpu_custom_call.1} parent=43 // pred_check
          %p1190 = pneg %p181
        $region62: #{tpu_custom_call.1} parent=43 // pred_check_branch
          %1192 = sbr.rel (%p1190) target = $region64
        $region63: #{tpu_custom_call.1} parent=43 // pred_region
          %s1194 = ssub.s32 128, 128
          %1195 = vsyncadd %s1186, %s1194
          %s1196 = smul.addr %s27, 128
          %s1197 = scalar_lea.hbm %s6, %s1196
          %s1199 = sshll.u32 %s1189, 4
          %s1200 = int_to_ptr.vmem [resolvable:$true] %s1199
          %1202 = dma.vmem_to_hbm [thread:$0]  %s1200, 128, %s1197, %s1186
        $region64: #{tpu_custom_call.1} parent=43 // pred_fallthru
          _
      $region44: #{tpu_custom_call.1} parent=5 // pred_fallthru
        _
      %p1203 = scmp.le.s32.totalorder 2, %s22
      // Predicated region
      $region65: #{tpu_custom_call.1} parent=5 // pred_check
        %p1204 = pneg %p1203
      $region66: #{tpu_custom_call.1} parent=5 // pred_check_branch
        %1206 = sbr.rel (%p1204) target = $region68
      $region67: #{tpu_custom_call.1} parent=5 // pred_region
        %s1207 = ssub.s32 %s22, 2
        // Predicated region
        $region69: #{tpu_custom_call.1} parent=67 // pred_check
          %p1208 = pneg %p187
        $region70: #{tpu_custom_call.1} parent=67 // pred_check_branch
          %1210 = sbr.rel (%p1208) target = $region72
        $region71: #{tpu_custom_call.1} parent=67 // pred_region
          %s1211 = sand.u32 %s172, 1
          %s1212 = scalar_lea.sflag [#allocation4], %s1211
          %s1213 = sand.u32 %s172, 1
          %s1214 = smul.addr %s1213, 8
          %s1215 = scalar_lea.vmem [#allocation10], %s1214
          %1216 = dma.done %s1212, 128
        $region72: #{tpu_custom_call.1} parent=67 // pred_fallthru
          _
      $region68: #{tpu_custom_call.1} parent=5 // pred_fallthru
        _
    $region6: #{tpu_custom_call.1} parent=1 // loop_footer
      %s26 = sadd.s32 1, %s22
    $region7: #{tpu_custom_call.1} parent=1 // loop_footer_branch
      %21 = sbr.rel target = $region3
    $region8: #{tpu_custom_call.1} parent=1 // loop_exit
      _
    %1217 = vsyncpa [#allocation3], 1
    %s1218 = scalar_lea.sflag [#allocation3], 1
    %1219 = vsyncpa %s1218, 1
    %1220 = vsyncpa [#allocation6], 1
    %s1221 = scalar_lea.sflag [#allocation6], 1
    %1222 = vsyncpa %s1221, 1
    %1223 = vsyncpa [#allocation9], 1
    %1224 = vsyncpa [#allocation4], 1
    %s1225 = scalar_lea.sflag [#allocation4], 1
    %1226 = vsyncpa %s1225, 1

</llo_original>
